<compile_context>
chip_gen: v7x
topology: tpu7x:2x2x1
jax: 0.10.0
libtpu: 0.0.40
codegen_flags: <defaults>
</compile_context>

<pallas_src>
import jax
import jax.numpy as jnp
from jax.experimental import pallas as pl
from jax.experimental.pallas import tpu as pltpu


# ---------------------------------------------------------------------------
# Kernels
# ---------------------------------------------------------------------------
def _softmax_rows_kernel(x_ref, o_ref):
    """Single-pass row softmax.  x_ref / o_ref: (TILE_R, HW); reduce over lanes."""
    x = x_ref[...].astype(jnp.float32)
    m = jnp.max(x, axis=-1, keepdims=True)        # XLU reduction
    e = jnp.exp(x - m)                            # EUP
    s = jnp.sum(e, axis=-1, keepdims=True)        # XLU reduction
    # Exact divide: this kernel is HBM-bandwidth-bound with huge VPU slack, so
    # the (TILE_R, 1) divide is free and keeps exact softmax numerics.
    o_ref[...] = (e / s).astype(o_ref.dtype)


def _softmax_rows_2pass_kernel(x_ref, o_ref, m_ref, l_ref):
    """Two-pass online row softmax for large HW.

    grid = (row_tiles, pass, hw_tiles); pass 0 accumulates running max `m` and
    running denominator `l` in VMEM scratch, pass 1 re-reads the input and
    writes exp(x - m) / l.  Only pass-1 writes reach HBM (output index map
    keeps the block resident during pass 0).
    """
    p = pl.program_id(1)
    k = pl.program_id(2)

    x = x_ref[...].astype(jnp.float32)

    @pl.when(jnp.logical_and(p == 0, k == 0))
    def _():
        m_ref[...] = jnp.full_like(m_ref, -jnp.inf)
        l_ref[...] = jnp.zeros_like(l_ref)

    @pl.when(p == 0)
    def _():
        m_prev = m_ref[...]
        m_new = jnp.maximum(m_prev, jnp.max(x, axis=-1, keepdims=True))
        l_ref[...] = (l_ref[...] * jnp.exp(m_prev - m_new)
                      + jnp.sum(jnp.exp(x - m_new), axis=-1, keepdims=True))
        m_ref[...] = m_new

    @pl.when(p == 1)
    def _():
        o_ref[...] = (jnp.exp(x - m_ref[...]) / l_ref[...]).astype(o_ref.dtype)


# ---------------------------------------------------------------------------
# Tiling plan
# ---------------------------------------------------------------------------
def _row_granularity(dtype):
    """Packed sublane granularity: 8 rows for f32, 16 for bf16, 32 for 8-bit."""
    itemsize = max(1, jnp.dtype(dtype).itemsize)
    return 8 * max(1, 4 // itemsize)


def _bytes_per_row(hw_cols, in_bytes, out_bytes):
    # Double-buffered input + double-buffered output + ~2 f32 in-kernel temps
    # (the f32 upcast of x and the exp tile).
    return hw_cols * (2 * in_bytes + 2 * out_bytes + 2 * 4)


def _plan(rows, hw, in_dtype, out_dtype):
    in_bytes = jnp.dtype(in_dtype).itemsize
    out_bytes = jnp.dtype(out_dtype).itemsize
    gran = _row_granularity(in_dtype)

    try:
        vmem_cap = int(pltpu.get_tpu_info().vmem_capacity_bytes)
    except Exception:
        vmem_cap = 64 * 1024 * 1024  # conservative (v7x-sized) fallback

    if vmem_cap <= 64 * 1024 * 1024:      # v7x-class: 64 MiB per TensorCore
        vmem_limit = 48 * 1024 * 1024
    else:                                  # v5e / v6e: 128 MiB physical
        vmem_limit = 64 * 1024 * 1024
    tile_budget = (vmem_limit * 3) // 4    # headroom for pipeline bookkeeping

    # --- single-pass: full HW on lanes, tile only the row axis -------------
    bpr = _bytes_per_row(hw, in_bytes, out_bytes)
    max_rows = tile_budget // bpr
    if rows <= max_rows:
        return {"mode": "single", "tile_r": rows, "tile_hw": hw,
                "vmem_limit": vmem_limit}
    tile_r = (max_rows // gran) * gran
    if tile_r >= gran:
        return {"mode": "single", "tile_r": int(tile_r), "tile_hw": hw,
                "vmem_limit": vmem_limit}

    # --- large-HW path: tile HW (multiple of 128, divisor of hw) -----------
    tile_hw = None
    t = (hw // 128) * 128
    while t >= 128:
        if hw % t == 0 and _bytes_per_row(t, in_bytes, out_bytes) * gran <= tile_budget:
            tile_hw = t
            break
        t -= 128
    if tile_hw is None:
        # HW not tileable on a 128-lane boundary; fall back to the minimal row
        # tile and let the raised vmem limit absorb it.
        return {"mode": "single", "tile_r": min(rows, gran), "tile_hw": hw,
                "vmem_limit": vmem_limit}
    max_rows = tile_budget // _bytes_per_row(tile_hw, in_bytes, out_bytes)
    tile_r = max(gran, (max_rows // gran) * gran)
    tile_r = min(int(tile_r), rows)
    return {"mode": "two_pass", "tile_r": tile_r, "tile_hw": int(tile_hw),
            "vmem_limit": vmem_limit}


# ---------------------------------------------------------------------------
# Public wrapper (ChannelNorm.forward equivalent)
# ---------------------------------------------------------------------------
def channel_norm(featmap, *, tile_r=None, tile_hw=None):
    """Equivalent of ChannelNorm.forward: (n, c, h, w) -> (n, c, h*w) softmax over h*w."""
    n, c, h, w = featmap.shape
    hw = h * w
    rows = n * c
    x = featmap.reshape((rows, hw))
    out_dtype = featmap.dtype

    plan = _plan(rows, hw, featmap.dtype, out_dtype)
    if tile_r is not None:
        plan["tile_r"] = max(1, min(int(tile_r), rows))
    if tile_hw is not None:
        plan["tile_hw"] = int(tile_hw)
        plan["mode"] = "single" if plan["tile_hw"] == hw else "two_pass"

    tr = plan["tile_r"]
    thw = plan["tile_hw"]
    vmem_limit = plan["vmem_limit"]

    if plan["mode"] == "single":
        out = pl.pallas_call(
            _softmax_rows_kernel,
            out_shape=jax.ShapeDtypeStruct((rows, hw), out_dtype),
            grid_spec=pltpu.PrefetchScalarGridSpec(
                num_scalar_prefetch=0,
                grid=(pl.cdiv(rows, tr),),
                in_specs=[pl.BlockSpec((tr, hw), lambda i: (i, 0))],
                out_specs=pl.BlockSpec((tr, hw), lambda i: (i, 0)),
            ),
            compiler_params=pltpu.CompilerParams(
                dimension_semantics=("parallel",),
                vmem_limit_bytes=vmem_limit,
            ),
        )(x)
    else:
        assert hw % thw == 0 and thw % 128 == 0, (hw, thw)
        nk = hw // thw
        out = pl.pallas_call(
            _softmax_rows_2pass_kernel,
            out_shape=jax.ShapeDtypeStruct((rows, hw), out_dtype),
            grid_spec=pltpu.PrefetchScalarGridSpec(
                num_scalar_prefetch=0,
                grid=(pl.cdiv(rows, tr), 2, nk),
                in_specs=[pl.BlockSpec((tr, thw), lambda i, p, k: (i, k))],
                # (i, p*k): output block stays resident (and unwritten) during
                # the stats pass; only pass-1 writes are flushed to HBM.
                out_specs=pl.BlockSpec((tr, thw), lambda i, p, k: (i, p * k)),
                scratch_shapes=[pltpu.VMEM((tr, 1), jnp.float32),   # running max
                                pltpu.VMEM((tr, 1), jnp.float32)],  # running denom
            ),
            compiler_params=pltpu.CompilerParams(
                dimension_semantics=("parallel", "arbitrary", "arbitrary"),
                vmem_limit_bytes=vmem_limit,
            ),
        )(x)

    return out.reshape((n, c, hw))


if __name__ == "__main__":
    key = jax.random.PRNGKey(0)
    n, c, h, w = 2, 4, 16, 16
    x = jax.random.normal(key, (n, c, h, w), dtype=jnp.float32)

    # Single-pass path (auto-selected for this small shape).
    out = jax.block_until_ready(channel_norm(x))

    ref = jax.nn.softmax(x.reshape((n, c, h * w)), axis=-1)
    assert out.shape == (n, c, h * w)
    assert jnp.allclose(out, ref, atol=1e-5, rtol=1e-5), "single-pass mismatch"

    # Exercise the large-HW (two-pass online softmax) path on the same data by
    # forcing an HW tile of 128 lanes.
    out2 = jax.block_until_ready(channel_norm(x, tile_hw=128))
    assert jnp.allclose(out2, ref, atol=1e-5, rtol=1e-5), "two-pass mismatch"

    print("KERNEL_OK")
</pallas_src>

<mosaic_0001>
module attributes {stable_mosaic.version = 11 : i64} {
  func.func @_softmax_rows_kernel(%arg0: i32, %arg1: memref<8x256xf32, #tpu.memory_space<vmem>>, %arg2: memref<8x256xf32, #tpu.memory_space<vmem>>) attributes {dimension_semantics = [#tpu.dimension_semantics<parallel>], iteration_bounds = array<i64: 1>, scalar_prefetch = 0 : i64, scratch_operands = 0 : i64, tpu.core_type = #tpu.core_type<tc>, window_params = [{transform_indices = @transform_0, window_bounds = array<i64: 8, 256>}, {transform_indices = @transform_1, window_bounds = array<i64: 8, 256>}]} {
    %c0 = arith.constant 0 : index
    %c0_0 = arith.constant 0 : index
    %0 = vector.load %arg1[%c0, %c0_0] : memref<8x256xf32, #tpu.memory_space<vmem>>, vector<8x256xf32>
    %cst = arith.constant dense<0xFF800000> : vector<8xf32>
    %1 = vector.multi_reduction <maximumf>, %0, %cst [1] : vector<8x256xf32> to vector<8xf32>
    %2 = vector.shape_cast %1 : vector<8xf32> to vector<8x1xf32>
    %3 = vector.broadcast %2 : vector<8x1xf32> to vector<8x256xf32>
    %4 = arith.subf %0, %3 : vector<8x256xf32>
    %5 = math.exp %4 : vector<8x256xf32>
    %cst_1 = arith.constant dense<0.000000e+00> : vector<8xf32>
    %6 = vector.multi_reduction <add>, %5, %cst_1 [1] : vector<8x256xf32> to vector<8xf32>
    %7 = vector.shape_cast %6 : vector<8xf32> to vector<8x1xf32>
    %8 = vector.broadcast %7 : vector<8x1xf32> to vector<8x256xf32>
    %9 = arith.divf %5, %8 : vector<8x256xf32>
    %c0_2 = arith.constant 0 : index
    %c0_3 = arith.constant 0 : index
    %10 = vector.load %arg2[%c0_2, %c0_3] : memref<8x256xf32, #tpu.memory_space<vmem>>, vector<8x256xf32>
    tpu.vector_store %arg2[%c0_2, %c0_3], %9 {strides = array<i32>} : memref<8x256xf32, #tpu.memory_space<vmem>>, vector<8x256xf32>,
    return
  }
  func.func @transform_0(%arg0: i32) -> (i32, i32) {
    %c0_i32 = arith.constant 0 : i32
    %c0_i32_0 = arith.constant 0 : i32
    return %arg0, %c0_i32 : i32, i32
  }
  func.func @transform_1(%arg0: i32) -> (i32, i32) {
    %c0_i32 = arith.constant 0 : i32
    %c0_i32_0 = arith.constant 0 : i32
    return %arg0, %c0_i32 : i32, i32
  }
}

</mosaic_0001>

<llo_original>
// kernel: tpu_custom_call.1
$region0: #{tpu_custom_call.1}
  #allocation0 [shape = 'u32[]', space=smem, size = 0x4, offset = 0x4, fixed_abs, tag = 'smem constant byte address 0x4 - core index']
  #allocation1 [shape = 'u32[144,128]{1,0:T(1,128)}', space=vmem, size = 0x12000, scoped, tag = 'internal scratch']
  %s0 = inlined_call_operand.hbm [shape: f32[8,256], index: 0, kind: input, shape index: {}]
  %s1 = inlined_call_operand.hbm [shape: f32[8,256], index: 1, kind: output, shape index: {}]
  %s2 = sld [smem:[#allocation0]]
  $region18: #{tpu_custom_call.1} parent=0
    _
  %s4 = ssub.s32 1, %s2
  %s5 = scalar_select 0, %s4, %s2
  $region1: #{tpu_custom_call.1} parent=0
    #allocation2 [shape = 'u8[8192]{0}', space=vmem, size = 0x2000, scoped, tag = 'input window, operand 0, single buffered']
    #allocation3 [shape = 's32[1]{0}', space=sflag, size = 0x4, scoped, tag = 'scoped memory for tpu_custom_call.1']
    #allocation4 [shape = 's32[1]{0}', space=sflag, size = 0x4, scoped, tag = 'scoped memory for tpu_custom_call.1']
    #allocation5 [shape = 'u8[8192]{0}', space=vmem, size = 0x2000, scoped, tag = 'output window, operand 0, single buffered']
    %6 = vsyncpa [#allocation3], 0
    %7 = vsyncpa [#allocation4], 0
    // Predicated region
    $region2: #{tpu_custom_call.1} parent=1 // pred_check
      _
    $region3: #{tpu_custom_call.1} parent=1 // pred_check_branch
      %9 = sbr.rel (0) target = $region5
    $region4: #{tpu_custom_call.1} parent=1 // pred_region
      %s11 = ssub.s32 256, 256
      %12 = vsyncadd [#allocation3], %s11
      %s14 = sshll.u32 [#allocation2], 4
      %s15 = int_to_ptr.vmem [resolvable:$true] %s14
      %17 = dma.hbm_to_vmem [thread:$0]  %s0, 256, %s15, [#allocation3]
    $region5: #{tpu_custom_call.1} parent=1 // pred_fallthru
      _
    // Predicated region
    $region6: #{tpu_custom_call.1} parent=1 // pred_check
      _
    $region7: #{tpu_custom_call.1} parent=1 // pred_check_branch
      %19 = sbr.rel (0) target = $region9
    $region8: #{tpu_custom_call.1} parent=1 // pred_region
      %20 = dma.done [#allocation3], 256
    $region9: #{tpu_custom_call.1} parent=1 // pred_fallthru
      _
    %v21 = vld [vmem:[#allocation2] sm:$0xff]
    %v22 = vld [vmem:[#allocation2 + $0x8] sm:$0xff]
    %v23 = vmax.f32 %v21, %v22
    %24 = vmax.xlane.f32.xlu0 %v23
    %v25 = vpop.xlane.xlu0 %24
    %v26 = vsub.f32 %v21, %v25
    %v27 = vsub.f32 %v22, %v25
    %v28 = vmul.f32 %v26, 1.442695
    %v29 = vpow.pop %v28
    %v30 = vmul.f32 %v27, 1.442695
    %v31 = vpow.pop %v30
    %v32 = vadd.f32 %v29, %v31
    %33 = vadd.xlane.f32.xlu0 %v32
    %v34 = vpop.xlane.xlu0 %33
    %v35 = vrcp.pop %v34
    %v36 = vmul.f32 %v29, %v35
    %v37 = vmul.f32 %v31, %v35
    %38 = vst [vmem:[#allocation5] sm:$0xff] %v36
    %39 = vst [vmem:[#allocation5 + $0x8] sm:$0xff] %v37
    // Predicated region
    $region10: #{tpu_custom_call.1} parent=1 // pred_check
      _
    $region11: #{tpu_custom_call.1} parent=1 // pred_check_branch
      %41 = sbr.rel (0) target = $region13
    $region12: #{tpu_custom_call.1} parent=1 // pred_region
      %s43 = ssub.s32 256, 256
      %44 = vsyncadd [#allocation4], %s43
      %s46 = sshll.u32 [#allocation5], 4
      %s47 = int_to_ptr.vmem [resolvable:$true] %s46
      %49 = dma.vmem_to_hbm [thread:$0]  %s47, 256, %s1, [#allocation4]
    $region13: #{tpu_custom_call.1} parent=1 // pred_fallthru
      _
    // Predicated region
    $region14: #{tpu_custom_call.1} parent=1 // pred_check
      _
    $region15: #{tpu_custom_call.1} parent=1 // pred_check_branch
      %51 = sbr.rel (0) target = $region17
    $region16: #{tpu_custom_call.1} parent=1 // pred_region
      %52 = dma.done [#allocation4], 256
    $region17: #{tpu_custom_call.1} parent=1 // pred_fallthru
      _
    %53 = vsyncpa [#allocation3], 1
    %54 = vsyncpa [#allocation4], 1

</llo_original>
